<compile_context>
chip_gen: v5e
topology: v5e:2x2
jax: 0.10.0
libtpu: 0.0.40
codegen_flags: <defaults>
</compile_context>

<pallas_src>
import functools

import jax
import jax.numpy as jnp
from jax import lax
from jax.experimental import pallas as pl
from jax.experimental.pallas import tpu as pltpu


def _bert_output_kernel(x_ref, w_ref, b_ref, res_ref, gamma_ref, beta_ref,
                        o_ref, *, eps, inv_h):
    # x_ref:     (TM, I)   activations from the intermediate layer (native dtype)
    # w_ref:     (I,  H)   dense weight, stored [in, out] (native dtype)
    # b_ref:     (1,  H)   dense bias
    # res_ref:   (TM, H)   residual input_tensor
    # gamma_ref: (1,  H)   LayerNorm weight
    # beta_ref:  (1,  H)   LayerNorm bias
    # o_ref:     (TM, H)   output

    # MXU matmul on native-dtype inputs; f32 accumulator only.
    y = jnp.dot(x_ref[...], w_ref[...], preferred_element_type=jnp.float32)

    # f32 epilogue: bias, dropout (identity in eval), residual.
    y = y + b_ref[...].astype(jnp.float32)
    # TODO(synk): training-mode dropout (stochastic mask) not implemented; eval identity.
    y = y + res_ref[...].astype(jnp.float32)

    # TF-style LayerNorm: eps inside the sqrt, biased variance.
    # mean/var via sums * (1/H); rsqrt goes to the (otherwise idle) EUP slot.
    u = jnp.sum(y, axis=-1, keepdims=True) * inv_h
    d = y - u
    s = jnp.sum(d * d, axis=-1, keepdims=True) * inv_h
    norm = d * lax.rsqrt(s + eps)

    out = gamma_ref[...].astype(jnp.float32) * norm + beta_ref[...].astype(jnp.float32)
    o_ref[...] = out.astype(o_ref.dtype)


def bert_output(hidden_states, input_tensor, w, b, gamma, beta, *,
                eps=1e-12, tm=512):
    """Eval-mode BertOutput.

    hidden_states: [B, S, I], input_tensor: [B, S, H] -> [B, S, H].
    Dropout is the identity (inference); training-mode dropout is not provided.
    """
    B, S, I = hidden_states.shape
    H = input_tensor.shape[-1]
    M = B * S

    x2 = hidden_states.reshape(M, I)
    r2 = input_tensor.reshape(M, H)
    b2 = b.reshape(1, H)
    g2 = gamma.reshape(1, H)
    be2 = beta.reshape(1, H)

    x_item = jnp.dtype(hidden_states.dtype).itemsize
    r_item = jnp.dtype(input_tensor.dtype).itemsize
    w_item = jnp.dtype(w.dtype).itemsize

    def vmem_est(t):
        # Single-buffered weight + double-buffered x / residual / output tiles
        # + small broadcast params.
        return (I * H * w_item
                + 2 * t * I * x_item
                + 2 * t * H * r_item
                + 2 * t * H * x_item
                + 2 * 3 * H * 4)

    # Row-tile selection: largest tile whose resident footprint fits VMEM with
    # headroom for the f32 epilogue temporaries.  Small problems collapse to a
    # single grid step with tm rounded up to a sublane multiple.
    if M <= tm:
        tm_eff = max(8, -(-M // 8) * 8)          # round M up to a sublane multiple
    else:
        tm_eff = tm
        budget = 40 * 1024 * 1024
        while tm_eff > 64 and vmem_est(tm_eff) > budget:
            tm_eff //= 2

    m_pad = -(-M // tm_eff) * tm_eff             # pad rows instead of asserting divisibility
    if m_pad != M:
        x2 = jnp.pad(x2, ((0, m_pad - M), (0, 0)))
        r2 = jnp.pad(r2, ((0, m_pad - M), (0, 0)))

    grid = (m_pad // tm_eff,)

    kernel = functools.partial(_bert_output_kernel,
                               eps=float(eps), inv_h=1.0 / float(H))

    cost = pl.CostEstimate(
        flops=2 * m_pad * I * H + 6 * m_pad * H,
        transcendentals=m_pad,
        bytes_accessed=(m_pad * I * x_item + I * H * w_item
                        + m_pad * H * r_item + m_pad * H * x_item),
    )

    def call(weight_spec):
        out2 = pl.pallas_call(
            kernel,
            out_shape=jax.ShapeDtypeStruct((m_pad, H), hidden_states.dtype),
            grid_spec=pltpu.PrefetchScalarGridSpec(
                num_scalar_prefetch=0,
                grid=grid,
                in_specs=[
                    pl.BlockSpec((tm_eff, I), lambda i: (i, 0)),   # x row tile
                    weight_spec,                                    # full (I, H) weight
                    pl.BlockSpec((1, H), lambda i: (0, 0)),         # bias
                    pl.BlockSpec((tm_eff, H), lambda i: (i, 0)),    # residual row tile
                    pl.BlockSpec((1, H), lambda i: (0, 0)),         # LN gamma
                    pl.BlockSpec((1, H), lambda i: (0, 0)),         # LN beta
                ],
                out_specs=pl.BlockSpec((tm_eff, H), lambda i: (i, 0)),
            ),
            compiler_params=pltpu.CompilerParams(
                dimension_semantics=("parallel",),
                # Above the 16/32 MiB scoped defaults, still within v7x's 64 MiB.
                vmem_limit_bytes=48 * 1024 * 1024,
            ),
            cost_estimate=cost,
        )(x2, w, b2, r2, g2, be2)
        return jax.block_until_ready(out2)

    # Weight index_map is constant across the grid: request a single resident
    # buffer instead of double-buffering (halves the resident weight footprint,
    # which matters on v7x's 64 MiB VMEM).  Fall back to default pipelining if
    # this jax build rejects pipeline_mode / Buffered(1).
    try:
        out2 = call(pl.BlockSpec((I, H), lambda i: (0, 0),
                                 pipeline_mode=pl.Buffered(1)))
    except Exception:  # pragma: no cover - portability fallback
        out2 = call(pl.BlockSpec((I, H), lambda i: (0, 0)))

    if m_pad != M:
        out2 = out2[:M]
    return out2.reshape(B, S, H)


def reference(hidden_states, input_tensor, w, b, gamma, beta, eps=1e-12):
    y = jnp.einsum("bsi,ih->bsh", hidden_states.astype(jnp.float32),
                   w.astype(jnp.float32)) + b.astype(jnp.float32)
    y = y + input_tensor.astype(jnp.float32)
    u = jnp.mean(y, axis=-1, keepdims=True)
    s = jnp.mean((y - u) ** 2, axis=-1, keepdims=True)
    y = (y - u) / jnp.sqrt(s + eps)
    return gamma * y + beta


if __name__ == "__main__":
    # Toy config: intermediate_size=128, hidden_size=32.
    # (In real BERT configs H is a multiple of 128, giving lane-dense unmasked
    #  stores; H=32 here is only legal because it equals the full array dim.)
    B, S, I, H = 2, 8, 128, 32

    key = jax.random.PRNGKey(0)
    k1, k2, k3, k4 = jax.random.split(key, 4)

    hidden_states = jax.random.normal(k1, (B, S, I), dtype=jnp.float32)
    input_tensor = jax.random.normal(k2, (B, S, H), dtype=jnp.float32)

    # Dense weight stored [in, out]; deterministic init.
    w = jax.random.normal(k3, (I, H), dtype=jnp.float32) * 0.02
    b = jax.random.normal(k4, (H,), dtype=jnp.float32) * 0.02
    gamma = jnp.ones((H,), dtype=jnp.float32)   # LayerNorm weight
    beta = jnp.zeros((H,), dtype=jnp.float32)   # LayerNorm bias

    out = bert_output(hidden_states, input_tensor, w, b, gamma, beta)
    out = jax.block_until_ready(out)

    ref = reference(hidden_states, input_tensor, w, b, gamma, beta)
    assert out.shape == (B, S, H)
    assert jnp.allclose(out, ref, atol=1e-4, rtol=1e-4), "mismatch vs reference"

    print("KERNEL_OK")
</pallas_src>

<mosaic_0001>
module attributes {stable_mosaic.version = 11 : i64} {
  func.func @_bert_output_kernel(%arg0: i32, %arg1: memref<16x128xf32, #tpu.memory_space<vmem>>, %arg2: memref<128x32xf32, #tpu.memory_space<vmem>>, %arg3: memref<1x32xf32, #tpu.memory_space<vmem>>, %arg4: memref<16x32xf32, #tpu.memory_space<vmem>>, %arg5: memref<1x32xf32, #tpu.memory_space<vmem>>, %arg6: memref<1x32xf32, #tpu.memory_space<vmem>>, %arg7: memref<16x32xf32, #tpu.memory_space<vmem>>) attributes {dimension_semantics = [#tpu.dimension_semantics<parallel>], iteration_bounds = array<i64: 1>, scalar_prefetch = 0 : i64, scratch_operands = 0 : i64, tpu.core_type = #tpu.core_type<tc>, window_params = [{transform_indices = @transform_0, window_bounds = array<i64: 16, 128>}, {pipeline_mode = #tpu.pipeline_mode<synchronous>, transform_indices = @transform_1, window_bounds = array<i64: 128, 32>}, {pipeline_mode = #tpu.pipeline_mode<synchronous>, transform_indices = @transform_2, window_bounds = array<i64: 1, 32>}, {transform_indices = @transform_3, window_bounds = array<i64: 16, 32>}, {pipeline_mode = #tpu.pipeline_mode<synchronous>, transform_indices = @transform_4, window_bounds = array<i64: 1, 32>}, {pipeline_mode = #tpu.pipeline_mode<synchronous>, transform_indices = @transform_5, window_bounds = array<i64: 1, 32>}, {transform_indices = @transform_6, window_bounds = array<i64: 16, 32>}]} {
    %c0 = arith.constant 0 : index
    %c0_0 = arith.constant 0 : index
    %0 = vector.load %arg1[%c0, %c0_0] : memref<16x128xf32, #tpu.memory_space<vmem>>, vector<16x128xf32>
    %c0_1 = arith.constant 0 : index
    %c0_2 = arith.constant 0 : index
    %1 = vector.load %arg2[%c0_1, %c0_2] : memref<128x32xf32, #tpu.memory_space<vmem>>, vector<128x32xf32>
    %cst = arith.constant dense<0.000000e+00> : vector<16x32xf32>
    %2 = tpu.matmul %0, %1, %cst {dimension_numbers = #tpu.dot_dimension_numbers<[1], [0], [0], [1], [0, 0, 1, 1], [], []>} : vector<16x128xf32>, vector<128x32xf32>, vector<16x32xf32> -> vector<16x32xf32>
    %c0_3 = arith.constant 0 : index
    %c0_4 = arith.constant 0 : index
    %3 = vector.load %arg3[%c0_3, %c0_4] : memref<1x32xf32, #tpu.memory_space<vmem>>, vector<1x32xf32>
    %4 = vector.broadcast %3 : vector<1x32xf32> to vector<16x32xf32>
    %5 = arith.addf %2, %4 : vector<16x32xf32>
    %c0_5 = arith.constant 0 : index
    %c0_6 = arith.constant 0 : index
    %6 = vector.load %arg4[%c0_5, %c0_6] : memref<16x32xf32, #tpu.memory_space<vmem>>, vector<16x32xf32>
    %7 = arith.addf %5, %6 : vector<16x32xf32>
    %cst_7 = arith.constant dense<0.000000e+00> : vector<16xf32>
    %8 = vector.multi_reduction <add>, %7, %cst_7 [1] : vector<16x32xf32> to vector<16xf32>
    %9 = vector.shape_cast %8 : vector<16xf32> to vector<16x1xf32>
    %cst_8 = arith.constant 3.125000e-02 : f32
    %10 = vector.broadcast %cst_8 : f32 to vector<16x1xf32>
    %11 = arith.mulf %9, %10 : vector<16x1xf32>
    %12 = vector.broadcast %11 : vector<16x1xf32> to vector<16x32xf32>
    %13 = arith.subf %7, %12 : vector<16x32xf32>
    %14 = arith.mulf %13, %13 : vector<16x32xf32>
    %cst_9 = arith.constant dense<0.000000e+00> : vector<16xf32>
    %15 = vector.multi_reduction <add>, %14, %cst_9 [1] : vector<16x32xf32> to vector<16xf32>
    %16 = vector.shape_cast %15 : vector<16xf32> to vector<16x1xf32>
    %cst_10 = arith.constant 3.125000e-02 : f32
    %17 = vector.broadcast %cst_10 : f32 to vector<16x1xf32>
    %18 = arith.mulf %16, %17 : vector<16x1xf32>
    %cst_11 = arith.constant 9.99999996E-13 : f32
    %19 = vector.broadcast %cst_11 : f32 to vector<16x1xf32>
    %20 = arith.addf %18, %19 : vector<16x1xf32>
    %21 = math.rsqrt %20 : vector<16x1xf32>
    %22 = vector.broadcast %21 : vector<16x1xf32> to vector<16x32xf32>
    %23 = arith.mulf %13, %22 : vector<16x32xf32>
    %c0_12 = arith.constant 0 : index
    %c0_13 = arith.constant 0 : index
    %24 = vector.load %arg5[%c0_12, %c0_13] : memref<1x32xf32, #tpu.memory_space<vmem>>, vector<1x32xf32>
    %25 = vector.broadcast %24 : vector<1x32xf32> to vector<16x32xf32>
    %26 = arith.mulf %25, %23 : vector<16x32xf32>
    %c0_14 = arith.constant 0 : index
    %c0_15 = arith.constant 0 : index
    %27 = vector.load %arg6[%c0_14, %c0_15] : memref<1x32xf32, #tpu.memory_space<vmem>>, vector<1x32xf32>
    %28 = vector.broadcast %27 : vector<1x32xf32> to vector<16x32xf32>
    %29 = arith.addf %26, %28 : vector<16x32xf32>
    %c0_16 = arith.constant 0 : index
    %c0_17 = arith.constant 0 : index
    %30 = vector.load %arg7[%c0_16, %c0_17] : memref<16x32xf32, #tpu.memory_space<vmem>>, vector<16x32xf32>
    tpu.vector_store %arg7[%c0_16, %c0_17], %29 {strides = array<i32>} : memref<16x32xf32, #tpu.memory_space<vmem>>, vector<16x32xf32>,
    return
  }
  func.func @transform_0(%arg0: i32) -> (i32, i32) {
    %c0_i32 = arith.constant 0 : i32
    %c0_i32_0 = arith.constant 0 : i32
    return %arg0, %c0_i32 : i32, i32
  }
  func.func @transform_1(%arg0: i32) -> (i32, i32) {
    %c0_i32 = arith.constant 0 : i32
    %c0_i32_0 = arith.constant 0 : i32
    %c0_i32_1 = arith.constant 0 : i32
    return %c0_i32, %c0_i32_0 : i32, i32
  }
  func.func @transform_2(%arg0: i32) -> (i32, i32) {
    %c0_i32 = arith.constant 0 : i32
    %c0_i32_0 = arith.constant 0 : i32
    %c0_i32_1 = arith.constant 0 : i32
    return %c0_i32, %c0_i32_0 : i32, i32
  }
  func.func @transform_3(%arg0: i32) -> (i32, i32) {
    %c0_i32 = arith.constant 0 : i32
    %c0_i32_0 = arith.constant 0 : i32
    return %arg0, %c0_i32 : i32, i32
  }
  func.func @transform_4(%arg0: i32) -> (i32, i32) {
    %c0_i32 = arith.constant 0 : i32
    %c0_i32_0 = arith.constant 0 : i32
    %c0_i32_1 = arith.constant 0 : i32
    return %c0_i32, %c0_i32_0 : i32, i32
  }
  func.func @transform_5(%arg0: i32) -> (i32, i32) {
    %c0_i32 = arith.constant 0 : i32
    %c0_i32_0 = arith.constant 0 : i32
    %c0_i32_1 = arith.constant 0 : i32
    return %c0_i32, %c0_i32_0 : i32, i32
  }
  func.func @transform_6(%arg0: i32) -> (i32, i32) {
    %c0_i32 = arith.constant 0 : i32
    %c0_i32_0 = arith.constant 0 : i32
    return %arg0, %c0_i32 : i32, i32
  }
}

module attributes {stable_mosaic.version = 11 : i64} {
  func.func @_bert_output_kernel(%arg0: i32, %arg1: memref<16x128xf32, #tpu.memory_space<vmem>>, %arg2: memref<128x32xf32, #tpu.memory_space<vmem>>, %arg3: memref<1x32xf32, #tpu.memory_space<vmem>>, %arg4: memref<16x32xf32, #tpu.memory_space<vmem>>, %arg5: memref<1x32xf32, #tpu.memory_space<vmem>>, %arg6: memref<1x32xf32, #tpu.memory_space<vmem>>, %arg7: memref<16x32xf32, #tpu.memory_space<vmem>>) attributes {dimension_semantics = [#tpu.dimension_semantics<parallel>], iteration_bounds = array<i64: 1>, scalar_prefetch = 0 : i64, scratch_operands = 0 : i64, tpu.core_type = #tpu.core_type<tc>, window_params = [{transform_indices = @transform_0, window_bounds = array<i64: 16, 128>}, {pipeline_mode = #tpu.pipeline_mode<synchronous>, transform_indices = @transform_1, window_bounds = array<i64: 128, 32>}, {pipeline_mode = #tpu.pipeline_mode<synchronous>, transform_indices = @transform_2, window_bounds = array<i64: 1, 32>}, {transform_indices = @transform_3, window_bounds = array<i64: 16, 32>}, {pipeline_mode = #tpu.pipeline_mode<synchronous>, transform_indices = @transform_4, window_bounds = array<i64: 1, 32>}, {pipeline_mode = #tpu.pipeline_mode<synchronous>, transform_indices = @transform_5, window_bounds = array<i64: 1, 32>}, {transform_indices = @transform_6, window_bounds = array<i64: 16, 32>}]} {
    %c0 = arith.constant 0 : index
    %c0_0 = arith.constant 0 : index
    %0 = vector.load %arg1[%c0, %c0_0] : memref<16x128xf32, #tpu.memory_space<vmem>>, vector<16x128xf32>
    %c0_1 = arith.constant 0 : index
    %c0_2 = arith.constant 0 : index
    %1 = vector.load %arg2[%c0_1, %c0_2] : memref<128x32xf32, #tpu.memory_space<vmem>>, vector<128x32xf32>
    %cst = arith.constant dense<0.000000e+00> : vector<16x32xf32>
    %2 = tpu.matmul %0, %1, %cst {dimension_numbers = #tpu.dot_dimension_numbers<[1], [0], [0], [1], [0, 0, 1, 1], [], []>} : vector<16x128xf32>, vector<128x32xf32>, vector<16x32xf32> -> vector<16x32xf32>
    %c0_3 = arith.constant 0 : index
    %c0_4 = arith.constant 0 : index
    %3 = vector.load %arg3[%c0_3, %c0_4] : memref<1x32xf32, #tpu.memory_space<vmem>>, vector<1x32xf32>
    %4 = vector.broadcast %3 : vector<1x32xf32> to vector<16x32xf32>
    %5 = arith.addf %2, %4 : vector<16x32xf32>
    %c0_5 = arith.constant 0 : index
    %c0_6 = arith.constant 0 : index
    %6 = vector.load %arg4[%c0_5, %c0_6] : memref<16x32xf32, #tpu.memory_space<vmem>>, vector<16x32xf32>
    %7 = arith.addf %5, %6 : vector<16x32xf32>
    %cst_7 = arith.constant dense<0.000000e+00> : vector<16xf32>
    %8 = vector.multi_reduction <add>, %7, %cst_7 [1] : vector<16x32xf32> to vector<16xf32>
    %9 = vector.shape_cast %8 : vector<16xf32> to vector<16x1xf32>
    %cst_8 = arith.constant 3.125000e-02 : f32
    %10 = vector.broadcast %cst_8 : f32 to vector<16x1xf32>
    %11 = arith.mulf %9, %10 : vector<16x1xf32>
    %12 = vector.broadcast %11 : vector<16x1xf32> to vector<16x32xf32>
    %13 = arith.subf %7, %12 : vector<16x32xf32>
    %14 = arith.mulf %13, %13 : vector<16x32xf32>
    %cst_9 = arith.constant dense<0.000000e+00> : vector<16xf32>
    %15 = vector.multi_reduction <add>, %14, %cst_9 [1] : vector<16x32xf32> to vector<16xf32>
    %16 = vector.shape_cast %15 : vector<16xf32> to vector<16x1xf32>
    %cst_10 = arith.constant 3.125000e-02 : f32
    %17 = vector.broadcast %cst_10 : f32 to vector<16x1xf32>
    %18 = arith.mulf %16, %17 : vector<16x1xf32>
    %cst_11 = arith.constant 9.99999996E-13 : f32
    %19 = vector.broadcast %cst_11 : f32 to vector<16x1xf32>
    %20 = arith.addf %18, %19 : vector<16x1xf32>
    %21 = math.rsqrt %20 : vector<16x1xf32>
    %22 = vector.broadcast %21 : vector<16x1xf32> to vector<16x32xf32>
    %23 = arith.mulf %13, %22 : vector<16x32xf32>
    %c0_12 = arith.constant 0 : index
    %c0_13 = arith.constant 0 : index
    %24 = vector.load %arg5[%c0_12, %c0_13] : memref<1x32xf32, #tpu.memory_space<vmem>>, vector<1x32xf32>
    %25 = vector.broadcast %24 : vector<1x32xf32> to vector<16x32xf32>
    %26 = arith.mulf %25, %23 : vector<16x32xf32>
    %c0_14 = arith.constant 0 : index
    %c0_15 = arith.constant 0 : index
    %27 = vector.load %arg6[%c0_14, %c0_15] : memref<1x32xf32, #tpu.memory_space<vmem>>, vector<1x32xf32>
    %28 = vector.broadcast %27 : vector<1x32xf32> to vector<16x32xf32>
    %29 = arith.addf %26, %28 : vector<16x32xf32>
    %c0_16 = arith.constant 0 : index
    %c0_17 = arith.constant 0 : index
    %30 = vector.load %arg7[%c0_16, %c0_17] : memref<16x32xf32, #tpu.memory_space<vmem>>, vector<16x32xf32>
    tpu.vector_store %arg7[%c0_16, %c0_17], %29 {strides = array<i32>} : memref<16x32xf32, #tpu.memory_space<vmem>>, vector<16x32xf32>,
    return
  }
  func.func @transform_0(%arg0: i32) -> (i32, i32) {
    %c0_i32 = arith.constant 0 : i32
    %c0_i32_0 = arith.constant 0 : i32
    return %arg0, %c0_i32 : i32, i32
  }
  func.func @transform_1(%arg0: i32) -> (i32, i32) {
    %c0_i32 = arith.constant 0 : i32
    %c0_i32_0 = arith.constant 0 : i32
    %c0_i32_1 = arith.constant 0 : i32
    return %c0_i32, %c0_i32_0 : i32, i32
  }
  func.func @transform_2(%arg0: i32) -> (i32, i32) {
    %c0_i32 = arith.constant 0 : i32
    %c0_i32_0 = arith.constant 0 : i32
    %c0_i32_1 = arith.constant 0 : i32
    return %c0_i32, %c0_i32_0 : i32, i32
  }
  func.func @transform_3(%arg0: i32) -> (i32, i32) {
    %c0_i32 = arith.constant 0 : i32
    %c0_i32_0 = arith.constant 0 : i32
    return %arg0, %c0_i32 : i32, i32
  }
  func.func @transform_4(%arg0: i32) -> (i32, i32) {
    %c0_i32 = arith.constant 0 : i32
    %c0_i32_0 = arith.constant 0 : i32
    %c0_i32_1 = arith.constant 0 : i32
    return %c0_i32, %c0_i32_0 : i32, i32
  }
  func.func @transform_5(%arg0: i32) -> (i32, i32) {
    %c0_i32 = arith.constant 0 : i32
    %c0_i32_0 = arith.constant 0 : i32
    %c0_i32_1 = arith.constant 0 : i32
    return %c0_i32, %c0_i32_0 : i32, i32
  }
  func.func @transform_6(%arg0: i32) -> (i32, i32) {
    %c0_i32 = arith.constant 0 : i32
    %c0_i32_0 = arith.constant 0 : i32
    return %arg0, %c0_i32 : i32, i32
  }
}

</mosaic_0001>

<llo_original>
// kernel: tpu_custom_call.1
$region0: #{tpu_custom_call.1}
  #allocation0 [shape = 'u32[]', space=smem, size = 0x4, offset = 0x4, fixed_abs, tag = 'smem constant byte address 0x4 - core index']
  #allocation1 [shape = 'u32[72,128]{1,0:T(1,128)}', space=vmem, size = 0x9000, scoped, tag = 'internal scratch']
  %s0 = inlined_call_operand.vmem [shape: f32[16,128], index: 0, kind: input, shape index: {}]
  %s1 = inlined_call_operand.vmem [shape: f32[128,32], index: 1, kind: input, shape index: {}]
  %s2 = inlined_call_operand.vmem [shape: f32[1,32], index: 2, kind: input, shape index: {}]
  %s3 = inlined_call_operand.vmem [shape: f32[16,32], index: 3, kind: input, shape index: {}]
  %s4 = inlined_call_operand.vmem [shape: f32[1,32], index: 4, kind: input, shape index: {}]
  %s5 = inlined_call_operand.vmem [shape: f32[1,32], index: 5, kind: input, shape index: {}]
  %s6 = inlined_call_operand.hbm [shape: f32[16,32], index: 6, kind: output, shape index: {}]
  %s7 = sld [smem:[#allocation0]]
  $region34: #{tpu_custom_call.1} parent=0
    _
  %s9 = ssub.s32 1, %s7
  %s10 = scalar_select 0, %s9, %s7
  $region1: #{tpu_custom_call.1} parent=0
    #allocation2 [shape = 'u8[8192]{0}', space=vmem, size = 0x2000, scoped, tag = 'output window, operand 0, single buffered']
    #allocation3 [shape = 's32[1]{0}', space=sflag, size = 0x4, scoped, tag = 'scoped memory for tpu_custom_call.1']
    %11 = vsyncpa [#allocation3], 0
    // Predicated region
    $region2: #{tpu_custom_call.1} parent=1 // pred_check
      _
    $region3: #{tpu_custom_call.1} parent=1 // pred_check_branch
      %13 = sbr.rel (0) target = $region5
    $region4: #{tpu_custom_call.1} parent=1 // pred_region
      _
    $region5: #{tpu_custom_call.1} parent=1 // pred_fallthru
      _
    // Predicated region
    $region6: #{tpu_custom_call.1} parent=1 // pred_check
      _
    $region7: #{tpu_custom_call.1} parent=1 // pred_check_branch
      %15 = sbr.rel (0) target = $region9
    $region8: #{tpu_custom_call.1} parent=1 // pred_region
      _
    $region9: #{tpu_custom_call.1} parent=1 // pred_fallthru
      _
    // Predicated region
    $region10: #{tpu_custom_call.1} parent=1 // pred_check
      _
    $region11: #{tpu_custom_call.1} parent=1 // pred_check_branch
      %17 = sbr.rel (0) target = $region13
    $region12: #{tpu_custom_call.1} parent=1 // pred_region
      _
    $region13: #{tpu_custom_call.1} parent=1 // pred_fallthru
      _
    // Predicated region
    $region14: #{tpu_custom_call.1} parent=1 // pred_check
      _
    $region15: #{tpu_custom_call.1} parent=1 // pred_check_branch
      %19 = sbr.rel (0) target = $region17
    $region16: #{tpu_custom_call.1} parent=1 // pred_region
      _
    $region17: #{tpu_custom_call.1} parent=1 // pred_fallthru
      _
    // Predicated region
    $region18: #{tpu_custom_call.1} parent=1 // pred_check
      _
    $region19: #{tpu_custom_call.1} parent=1 // pred_check_branch
      %21 = sbr.rel (0) target = $region21
    $region20: #{tpu_custom_call.1} parent=1 // pred_region
      _
    $region21: #{tpu_custom_call.1} parent=1 // pred_fallthru
      _
    // Predicated region
    $region22: #{tpu_custom_call.1} parent=1 // pred_check
      _
    $region23: #{tpu_custom_call.1} parent=1 // pred_check_branch
      %23 = sbr.rel (0) target = $region25
    $region24: #{tpu_custom_call.1} parent=1 // pred_region
      _
    $region25: #{tpu_custom_call.1} parent=1 // pred_fallthru
      _
    %v24 = vld [vmem:[%s0] sm:$0xff]
    %v25 = vld [vmem:[%s0 + $0x8] sm:$0xff]
    %v26 = vld [vmem:[%s1] sm:$0xff]
    %v27 = vld [vmem:[%s1 + $0x8] sm:$0xff]
    %v28 = vld [vmem:[%s1 + $0x10] sm:$0xff]
    %v29 = vld [vmem:[%s1 + $0x18] sm:$0xff]
    %v30 = vld [vmem:[%s1 + $0x20] sm:$0xff]
    %v31 = vld [vmem:[%s1 + $0x28] sm:$0xff]
    %v32 = vld [vmem:[%s1 + $0x30] sm:$0xff]
    %v33 = vld [vmem:[%s1 + $0x38] sm:$0xff]
    %v34 = vld [vmem:[%s1 + $0x40] sm:$0xff]
    %v35 = vld [vmem:[%s1 + $0x48] sm:$0xff]
    %v36 = vld [vmem:[%s1 + $0x50] sm:$0xff]
    %v37 = vld [vmem:[%s1 + $0x58] sm:$0xff]
    %v38 = vld [vmem:[%s1 + $0x60] sm:$0xff]
    %v39 = vld [vmem:[%s1 + $0x68] sm:$0xff]
    %v40 = vld [vmem:[%s1 + $0x70] sm:$0xff]
    %v41 = vld [vmem:[%s1 + $0x78] sm:$0xff]
    %v42 = vld [vmem:[%s2] sm:$0x1]
    %v44 = vperm.slane %v42, 0
    %46 = vmatpush.msra.mxu0 %v41
    %47 = vmatpush.msra.mxu0 %v40
    %48 = vmatpush.msra.mxu0 %v39
    %49 = vmatpush.msra.mxu0 %v38
    %50 = vmatpush.msra.mxu0 %v37
    %51 = vmatpush.msra.mxu0 %v36
    %52 = vmatpush.msra.mxu0 %v35
    %53 = vmatpush.msra.mxu0 %v34
    %54 = vmatpush.msra.mxu0 %v33
    %55 = vmatpush.msra.mxu0 %v32
    %56 = vmatpush.msra.mxu0 %v31
    %57 = vmatpush.msra.mxu0 %v30
    %58 = vmatpush.msra.mxu0 %v29
    %59 = vmatpush.msra.mxu0 %v28
    %60 = vmatpush.msra.mxu0 %v27
    %61 = vmatpush.msra.mxu0 %v26
    %62 = vmatmul.f32.gmra.mxu0 %v24
    %v63 = vpop.f32.mrf.mxu0
    %v64 = vadd.f32 %v44, %v63
    %65 = vmatmul.f32.gmra.mxu0 %v25
    %v66 = vpop.f32.mrf.mxu0
    %v67 = vadd.f32 %v44, %v66
    %68 = vdwg.mxu0
    %v69 = vld [vmem:[%s3] sm:$0xff]
    %v70 = vld [vmem:[%s3 + $0x8] sm:$0xff]
    %v71 = vadd.f32 %v64, %v69
    %v72 = vadd.f32 %v67, %v70
    %vm73 = vcmask 261120
    %v74 = vsel %vm73, %v71, 0.0
    %75 = vadd.xlane.f32.xlu0 %v74
    %v76 = vpop.xlane.xlu0 %75
    %v77 = vsel %vm73, %v72, 0.0
    %78 = vadd.xlane.f32.xlu0 %v77
    %v79 = vpop.xlane.xlu0 %78
    %v80 = vmul.f32 %v76, 0.03125
    %v81 = vmul.f32 %v79, 0.03125
    %v82 = vsub.f32 %v71, %v80
    %v83 = vsub.f32 %v72, %v81
    %v84 = vmul.f32 %v82, %v82
    %v85 = vmul.f32 %v83, %v83
    %v86 = vsel %vm73, %v84, 0.0
    %87 = vadd.xlane.f32.xlu0 %v86
    %v88 = vpop.xlane.xlu0 %87
    %v89 = vsel %vm73, %v85, 0.0
    %90 = vadd.xlane.f32.xlu0 %v89
    %v91 = vpop.xlane.xlu0 %90
    %v92 = vmul.f32 %v88, 0.03125
    %v93 = vmul.f32 %v91, 0.03125
    %v94 = vadd.f32 %v92, 1e-12
    %v95 = vadd.f32 %v93, 1e-12
    %v96 = vrsqrt.pop %v94
    %v97 = vmul.f32 %v96, %v94
    %v98 = vmul.f32 %v97, %v96
    %v99 = vmul.f32 0.5, %v98
    %v100 = vsub.f32 1.5, %v99
    %v101 = vmul.f32 %v96, %v100
    %vm102 = vweird.f32 %v94
    %vm103 = vweird.f32 %v96
    %vm104 = vmor %vm102, %vm103
    %v105 = vsel %vm104, %v96, %v101
    %v106 = vrsqrt.pop %v95
    %v107 = vmul.f32 %v106, %v95
    %v108 = vmul.f32 %v107, %v106
    %v109 = vmul.f32 0.5, %v108
    %v110 = vsub.f32 1.5, %v109
    %v111 = vmul.f32 %v106, %v110
    %vm112 = vweird.f32 %v95
    %vm113 = vweird.f32 %v106
    %vm114 = vmor %vm112, %vm113
    %v115 = vsel %vm114, %v106, %v111
    %v116 = vmul.f32 %v82, %v105
    %v117 = vmul.f32 %v83, %v115
    %v118 = vld [vmem:[%s4] sm:$0x1]
    %v120 = vperm.slane %v118, 0
    %v122 = vmul.f32 %v120, %v116
    %v123 = vmul.f32 %v120, %v117
    %v124 = vld [vmem:[%s5] sm:$0x1]
    %v126 = vperm.slane %v124, 0
    %v128 = vadd.f32 %v122, %v126
    %v129 = vadd.f32 %v123, %v126
    %130 = vst.msk [vmem:[#allocation2] sm:$0xff] %vm73, %v128
    %131 = vst.msk [vmem:[#allocation2 + $0x8] sm:$0xff] %vm73, %v129
    // Predicated region
    $region26: #{tpu_custom_call.1} parent=1 // pred_check
      _
    $region27: #{tpu_custom_call.1} parent=1 // pred_check_branch
      %133 = sbr.rel (0) target = $region29
    $region28: #{tpu_custom_call.1} parent=1 // pred_region
      %135 = vsyncadd [#allocation3], 0
      %s136 = sshll.u32 [#allocation2], 4
      %s137 = int_to_ptr.vmem [resolvable:$true] %s136
      %s138 = sshll.u32 %s6, 4
      %s139 = int_to_ptr.hbm [resolvable:$true] %s138
      %144 = dma.vmem_to_hbm [thread:$0]  %s137, 256, %s139, [#allocation3], 128, 128, 8
    $region29: #{tpu_custom_call.1} parent=1 // pred_fallthru
      _
    // Predicated region
    $region30: #{tpu_custom_call.1} parent=1 // pred_check
      _
    $region31: #{tpu_custom_call.1} parent=1 // pred_check_branch
      %146 = sbr.rel (0) target = $region33
    $region32: #{tpu_custom_call.1} parent=1 // pred_region
      %148 = dma.done [#allocation3], 256
    $region33: #{tpu_custom_call.1} parent=1 // pred_fallthru
      _
    %149 = vsyncpa [#allocation3], 1

// kernel: tpu_custom_call.1
$region0: #{tpu_custom_call.1}
  #allocation0 [shape = 'u32[]', space=smem, size = 0x4, offset = 0x4, fixed_abs, tag = 'smem constant byte address 0x4 - core index']
  #allocation1 [shape = 'u32[72,128]{1,0:T(1,128)}', space=vmem, size = 0x9000, scoped, tag = 'internal scratch']
  %s0 = inlined_call_operand.vmem [shape: f32[16,128], index: 0, kind: input, shape index: {}]
  %s1 = inlined_call_operand.vmem [shape: f32[128,32], index: 1, kind: input, shape index: {}]
  %s2 = inlined_call_operand.vmem [shape: f32[1,32], index: 2, kind: input, shape index: {}]
  %s3 = inlined_call_operand.vmem [shape: f32[16,32], index: 3, kind: input, shape index: {}]
  %s4 = inlined_call_operand.vmem [shape: f32[1,32], index: 4, kind: input, shape index: {}]
  %s5 = inlined_call_operand.vmem [shape: f32[1,32], index: 5, kind: input, shape index: {}]
  %s6 = inlined_call_operand.hbm [shape: f32[16,32], index: 6, kind: output, shape index: {}]
  %s7 = sld [smem:[#allocation0]]
  $region34: #{tpu_custom_call.1} parent=0
    _
  %s9 = ssub.s32 1, %s7
  %s10 = scalar_select 0, %s9, %s7
  $region1: #{tpu_custom_call.1} parent=0
    #allocation2 [shape = 'u8[8192]{0}', space=vmem, size = 0x2000, scoped, tag = 'output window, operand 0, single buffered']
    #allocation3 [shape = 's32[1]{0}', space=sflag, size = 0x4, scoped, tag = 'scoped memory for tpu_custom_call.1']
    %11 = vsyncpa [#allocation3], 0
    // Predicated region
    $region2: #{tpu_custom_call.1} parent=1 // pred_check
      _
    $region3: #{tpu_custom_call.1} parent=1 // pred_check_branch
      %13 = sbr.rel (0) target = $region5
    $region4: #{tpu_custom_call.1} parent=1 // pred_region
      _
    $region5: #{tpu_custom_call.1} parent=1 // pred_fallthru
      _
    // Predicated region
    $region6: #{tpu_custom_call.1} parent=1 // pred_check
      _
    $region7: #{tpu_custom_call.1} parent=1 // pred_check_branch
      %15 = sbr.rel (0) target = $region9
    $region8: #{tpu_custom_call.1} parent=1 // pred_region
      _
    $region9: #{tpu_custom_call.1} parent=1 // pred_fallthru
      _
    // Predicated region
    $region10: #{tpu_custom_call.1} parent=1 // pred_check
      _
    $region11: #{tpu_custom_call.1} parent=1 // pred_check_branch
      %17 = sbr.rel (0) target = $region13
    $region12: #{tpu_custom_call.1} parent=1 // pred_region
      _
    $region13: #{tpu_custom_call.1} parent=1 // pred_fallthru
      _
    // Predicated region
    $region14: #{tpu_custom_call.1} parent=1 // pred_check
      _
    $region15: #{tpu_custom_call.1} parent=1 // pred_check_branch
      %19 = sbr.rel (0) target = $region17
    $region16: #{tpu_custom_call.1} parent=1 // pred_region
      _
    $region17: #{tpu_custom_call.1} parent=1 // pred_fallthru
      _
    // Predicated region
    $region18: #{tpu_custom_call.1} parent=1 // pred_check
      _
    $region19: #{tpu_custom_call.1} parent=1 // pred_check_branch
      %21 = sbr.rel (0) target = $region21
    $region20: #{tpu_custom_call.1} parent=1 // pred_region
      _
    $region21: #{tpu_custom_call.1} parent=1 // pred_fallthru
      _
    // Predicated region
    $region22: #{tpu_custom_call.1} parent=1 // pred_check
      _
    $region23: #{tpu_custom_call.1} parent=1 // pred_check_branch
      %23 = sbr.rel (0) target = $region25
    $region24: #{tpu_custom_call.1} parent=1 // pred_region
      _
    $region25: #{tpu_custom_call.1} parent=1 // pred_fallthru
      _
    %v24 = vld [vmem:[%s0] sm:$0xff]
    %v25 = vld [vmem:[%s0 + $0x8] sm:$0xff]
    %v26 = vld [vmem:[%s1] sm:$0xff]
    %v27 = vld [vmem:[%s1 + $0x8] sm:$0xff]
    %v28 = vld [vmem:[%s1 + $0x10] sm:$0xff]
    %v29 = vld [vmem:[%s1 + $0x18] sm:$0xff]
    %v30 = vld [vmem:[%s1 + $0x20] sm:$0xff]
    %v31 = vld [vmem:[%s1 + $0x28] sm:$0xff]
    %v32 = vld [vmem:[%s1 + $0x30] sm:$0xff]
    %v33 = vld [vmem:[%s1 + $0x38] sm:$0xff]
    %v34 = vld [vmem:[%s1 + $0x40] sm:$0xff]
    %v35 = vld [vmem:[%s1 + $0x48] sm:$0xff]
    %v36 = vld [vmem:[%s1 + $0x50] sm:$0xff]
    %v37 = vld [vmem:[%s1 + $0x58] sm:$0xff]
    %v38 = vld [vmem:[%s1 + $0x60] sm:$0xff]
    %v39 = vld [vmem:[%s1 + $0x68] sm:$0xff]
    %v40 = vld [vmem:[%s1 + $0x70] sm:$0xff]
    %v41 = vld [vmem:[%s1 + $0x78] sm:$0xff]
    %v42 = vld [vmem:[%s2] sm:$0x1]
    %v44 = vperm.slane %v42, 0
    %46 = vmatpush.msra.mxu0 %v41
    %47 = vmatpush.msra.mxu0 %v40
    %48 = vmatpush.msra.mxu0 %v39
    %49 = vmatpush.msra.mxu0 %v38
    %50 = vmatpush.msra.mxu0 %v37
    %51 = vmatpush.msra.mxu0 %v36
    %52 = vmatpush.msra.mxu0 %v35
    %53 = vmatpush.msra.mxu0 %v34
    %54 = vmatpush.msra.mxu0 %v33
    %55 = vmatpush.msra.mxu0 %v32
    %56 = vmatpush.msra.mxu0 %v31
    %57 = vmatpush.msra.mxu0 %v30
    %58 = vmatpush.msra.mxu0 %v29
    %59 = vmatpush.msra.mxu0 %v28
    %60 = vmatpush.msra.mxu0 %v27
    %61 = vmatpush.msra.mxu0 %v26
    %62 = vmatmul.f32.gmra.mxu0 %v24
    %v63 = vpop.f32.mrf.mxu0
    %v64 = vadd.f32 %v44, %v63
    %65 = vmatmul.f32.gmra.mxu0 %v25
    %v66 = vpop.f32.mrf.mxu0
    %v67 = vadd.f32 %v44, %v66
    %68 = vdwg.mxu0
    %v69 = vld [vmem:[%s3] sm:$0xff]
    %v70 = vld [vmem:[%s3 + $0x8] sm:$0xff]
    %v71 = vadd.f32 %v64, %v69
    %v72 = vadd.f32 %v67, %v70
    %vm73 = vcmask 261120
    %v74 = vsel %vm73, %v71, 0.0
    %75 = vadd.xlane.f32.xlu0 %v74
    %v76 = vpop.xlane.xlu0 %75
    %v77 = vsel %vm73, %v72, 0.0
    %78 = vadd.xlane.f32.xlu0 %v77
    %v79 = vpop.xlane.xlu0 %78
    %v80 = vmul.f32 %v76, 0.03125
    %v81 = vmul.f32 %v79, 0.03125
    %v82 = vsub.f32 %v71, %v80
    %v83 = vsub.f32 %v72, %v81
    %v84 = vmul.f32 %v82, %v82
    %v85 = vmul.f32 %v83, %v83
    %v86 = vsel %vm73, %v84, 0.0
    %87 = vadd.xlane.f32.xlu0 %v86
    %v88 = vpop.xlane.xlu0 %87
    %v89 = vsel %vm73, %v85, 0.0
    %90 = vadd.xlane.f32.xlu0 %v89
    %v91 = vpop.xlane.xlu0 %90
    %v92 = vmul.f32 %v88, 0.03125
    %v93 = vmul.f32 %v91, 0.03125
    %v94 = vadd.f32 %v92, 1e-12
    %v95 = vadd.f32 %v93, 1e-12
    %v96 = vrsqrt.pop %v94
    %v97 = vmul.f32 %v96, %v94
    %v98 = vmul.f32 %v97, %v96
    %v99 = vmul.f32 0.5, %v98
    %v100 = vsub.f32 1.5, %v99
    %v101 = vmul.f32 %v96, %v100
    %vm102 = vweird.f32 %v94
    %vm103 = vweird.f32 %v96
    %vm104 = vmor %vm102, %vm103
    %v105 = vsel %vm104, %v96, %v101
    %v106 = vrsqrt.pop %v95
    %v107 = vmul.f32 %v106, %v95
    %v108 = vmul.f32 %v107, %v106
    %v109 = vmul.f32 0.5, %v108
    %v110 = vsub.f32 1.5, %v109
    %v111 = vmul.f32 %v106, %v110
    %vm112 = vweird.f32 %v95
    %vm113 = vweird.f32 %v106
    %vm114 = vmor %vm112, %vm113
    %v115 = vsel %vm114, %v106, %v111
    %v116 = vmul.f32 %v82, %v105
    %v117 = vmul.f32 %v83, %v115
    %v118 = vld [vmem:[%s4] sm:$0x1]
    %v120 = vperm.slane %v118, 0
    %v122 = vmul.f32 %v120, %v116
    %v123 = vmul.f32 %v120, %v117
    %v124 = vld [vmem:[%s5] sm:$0x1]
    %v126 = vperm.slane %v124, 0
    %v128 = vadd.f32 %v122, %v126
    %v129 = vadd.f32 %v123, %v126
    %130 = vst.msk [vmem:[#allocation2] sm:$0xff] %vm73, %v128
    %131 = vst.msk [vmem:[#allocation2 + $0x8] sm:$0xff] %vm73, %v129
    // Predicated region
    $region26: #{tpu_custom_call.1} parent=1 // pred_check
      _
    $region27: #{tpu_custom_call.1} parent=1 // pred_check_branch
      %133 = sbr.rel (0) target = $region29
    $region28: #{tpu_custom_call.1} parent=1 // pred_region
      %135 = vsyncadd [#allocation3], 0
      %s136 = sshll.u32 [#allocation2], 4
      %s137 = int_to_ptr.vmem [resolvable:$true] %s136
      %s138 = sshll.u32 %s6, 4
      %s139 = int_to_ptr.hbm [resolvable:$true] %s138
      %144 = dma.vmem_to_hbm [thread:$0]  %s137, 256, %s139, [#allocation3], 128, 128, 8
    $region29: #{tpu_custom_call.1} parent=1 // pred_fallthru
      _
    // Predicated region
    $region30: #{tpu_custom_call.1} parent=1 // pred_check
      _
    $region31: #{tpu_custom_call.1} parent=1 // pred_check_branch
      %146 = sbr.rel (0) target = $region33
    $region32: #{tpu_custom_call.1} parent=1 // pred_region
      %148 = dma.done [#allocation3], 256
    $region33: #{tpu_custom_call.1} parent=1 // pred_fallthru
      _
    %149 = vsyncpa [#allocation3], 1

</llo_original>
